<compile_context>
chip_gen: v5e
topology: v5e:2x2
jax: 0.10.0
libtpu: 0.0.40
codegen_flags: <defaults>
</compile_context>

<pallas_src>
import jax
import jax.numpy as jnp
from jax.experimental import pallas as pl
from jax.experimental.pallas import tpu as pltpu

_LANES = 128
_SUBLANES = 8
_MAX_TILE_ROWS = 8192  # (8192, 128) f32 = 4 MiB per image tile per input


def _plan_image_tiling(count):
    """Plan the kernel's share of the flattened image.

    Returns (rows_kernel, tile_rows, num_tiles, num_shards) with
    rows_kernel a multiple of 8 and tile_rows dividing rows_kernel exactly,
    so no padding / partial tiles are ever needed.
    """
    full_rows = count // _LANES
    rows8 = (full_rows // _SUBLANES) * _SUBLANES
    if rows8 == 0:
        return 0, 0, 0, 1

    if rows8 <= _MAX_TILE_ROWS:
        rows_kernel, tile_rows, num_tiles = rows8, rows8, 1
    else:
        # Keep the kernel region a multiple of 1024 rows so one of the tile
        # sizes below always divides it exactly.
        rows_kernel = (rows8 // 1024) * 1024
        tile_rows, num_tiles = 1024, rows_kernel // 1024
        for t in (_MAX_TILE_ROWS, 4096, 2048, 1024):
            if rows_kernel % t == 0:
                tile_rows, num_tiles = t, rows_kernel // t
                break

    # Split tiles across two shards (grid axis marked "parallel") so
    # multi-TensorCore parts (v7x) can run the reduction on both cores.
    num_shards = 1
    if num_tiles >= 2:
        if num_tiles % 2 == 0:
            num_shards = 2
        elif tile_rows % (2 * _SUBLANES) == 0:
            tile_rows //= 2
            num_tiles *= 2
            num_shards = 2
    return rows_kernel, tile_rows, num_tiles, num_shards


def _image_terms_kernel(imag_real_ref, imag_pred_ref, sq_ref, bin_ref):
    """Accumulate per-(sublane, lane) partial sums of (pred-real)^2 and
    1/((pred-0.5)^2+1e-5) into this shard's resident (1, 8, 128) output blocks."""

    @pl.when(pl.program_id(1) == 0)
    def _init():
        sq_ref[...] = jnp.zeros_like(sq_ref)
        bin_ref[...] = jnp.zeros_like(bin_ref)

    ip = imag_pred_ref[...].astype(jnp.float32)
    d = ip - imag_real_ref[...].astype(jnp.float32)

    c = ip - 0.5
    denom = c * c + 1e-5
    # EUP approximate reciprocal + one Newton-Raphson step (~1e-6 relative):
    # cheaper on the VALU slot than the exact-divide lowering.
    r = pl.reciprocal(denom, approx=True)
    r = r * (2.0 - denom * r)

    rows = d.shape[0]
    d2 = (d * d).reshape(rows // _SUBLANES, _SUBLANES, _LANES)
    bg = r.reshape(rows // _SUBLANES, _SUBLANES, _LANES)
    # Reduce only over the vreg-granular leading axis (pure VALU adds); the
    # cross-sublane / cross-lane reduction happens once in the wrapper.
    sq_ref[...] += jnp.sum(d2, axis=0, keepdims=True)
    bin_ref[...] += jnp.sum(bg, axis=0, keepdims=True)


def _image_partial_sums(imag_real_slab, imag_pred_slab, tile_rows, num_tiles,
                        num_shards):
    tiles_per_shard = num_tiles // num_shards

    in_spec = pl.BlockSpec((tile_rows, _LANES),
                           lambda s, i: (s * tiles_per_shard + i, 0))
    out_spec = pl.BlockSpec((1, _SUBLANES, _LANES), lambda s, i: (s, 0, 0))

    sq, bg = pl.pallas_call(
        _image_terms_kernel,
        out_shape=(
            jax.ShapeDtypeStruct((num_shards, _SUBLANES, _LANES), jnp.float32),
            jax.ShapeDtypeStruct((num_shards, _SUBLANES, _LANES), jnp.float32),
        ),
        grid=(num_shards, tiles_per_shard),
        in_specs=[in_spec, in_spec],
        out_specs=(out_spec, out_spec),
        compiler_params=pltpu.CompilerParams(
            dimension_semantics=("parallel", "arbitrary"),
            vmem_limit_bytes=48 * 1024 * 1024,
        ),
    )(imag_real_slab, imag_pred_slab)
    return jnp.sum(sq), jnp.sum(bg)


def tandem_loss_l1(feat_real, feat_pred, imag_real, imag_pred, gamma=0.0):
    imag_count = imag_real.size

    ir_flat = imag_real.reshape(-1)
    ip_flat = imag_pred.reshape(-1)

    rows_kernel, tile_rows, num_tiles, num_shards = _plan_image_tiling(imag_count)
    split = rows_kernel * _LANES

    sq_sum = jnp.float32(0.0)
    bin_sum = jnp.float32(0.0)

    if num_tiles > 0:
        # When split == imag_count (element count a multiple of 1024, the common
        # case for image batches) this is a pure metadata reshape -- no HBM copy.
        ir_main = ir_flat if split == imag_count else ir_flat[:split]
        ip_main = ip_flat if split == imag_count else ip_flat[:split]
        ir_slab = ir_main.reshape(rows_kernel, _LANES)
        ip_slab = ip_main.reshape(rows_kernel, _LANES)
        sq_k, bin_k = _image_partial_sums(ir_slab, ip_slab, tile_rows,
                                          num_tiles, num_shards)
        sq_sum = sq_sum + sq_k
        bin_sum = bin_sum + bin_k

    if split < imag_count:
        # Ragged tail (<= ~0.5 MiB worst case, usually empty): tiny XLA reduction.
        ir_t = ir_flat[split:].astype(jnp.float32)
        ip_t = ip_flat[split:].astype(jnp.float32)
        dt = ip_t - ir_t
        sq_sum = sq_sum + jnp.sum(dt * dt)
        bin_sum = bin_sum + jnp.sum(1.0 / ((ip_t - 0.5) ** 2 + 1e-5))

    image_loss = sq_sum / imag_count
    image_binary = bin_sum / imag_count

    # Curve (feature) MSE is tiny -> plain XLA; keeps kernel VMEM / pipeline
    # dedicated to the image slabs.
    fd = feat_pred.astype(jnp.float32) - feat_real.astype(jnp.float32)
    curve_loss = jnp.mean(fd * fd)

    loss = ((1.0 - gamma) * curve_loss
            + gamma * image_loss
            + gamma * 0.1 * image_binary)
    accu = image_binary
    return loss, accu


if __name__ == "__main__":
    key = jax.random.PRNGKey(0)
    k1, k2, k3, k4 = jax.random.split(key, 4)

    # Small shapes consistent with the forward: feature curves (N, D) and
    # images in NCHW (N, C, H, W).
    N, D = 2, 32
    C, H, W = 4, 16, 16
    feat_real = jax.random.normal(k1, (N, D), dtype=jnp.float32)
    feat_pred = jax.random.normal(k2, (N, D), dtype=jnp.float32)
    imag_real = jax.random.uniform(k3, (N, C, H, W), dtype=jnp.float32)
    imag_pred = jax.random.uniform(k4, (N, C, H, W), dtype=jnp.float32)

    gamma = 0.3  # constructor arg (module default is 0); static here

    loss, accu = jax.jit(tandem_loss_l1, static_argnums=(4,))(
        feat_real, feat_pred, imag_real, imag_pred, gamma)
    jax.block_until_ready((loss, accu))

    # Pure-JAX reference check of the forward semantics.
    curve_ref = jnp.mean((feat_pred - feat_real) ** 2)
    image_ref = jnp.mean((imag_pred - imag_real) ** 2)
    binary_ref = jnp.mean(1.0 / ((imag_pred - 0.5) ** 2 + 1e-5))
    loss_ref = (1 - gamma) * curve_ref + gamma * image_ref + gamma * 0.1 * binary_ref
    assert jnp.allclose(loss, loss_ref, rtol=1e-4, atol=1e-5), (loss, loss_ref)
    assert jnp.allclose(accu, binary_ref, rtol=1e-4, atol=1e-5), (accu, binary_ref)

    print("KERNEL_OK")
</pallas_src>

<mosaic_0001>
module attributes {stable_mosaic.version = 11 : i64} {
  func.func @_image_terms_kernel(%arg0: i32, %arg1: i32, %arg2: memref<16x128xf32, #tpu.memory_space<vmem>>, %arg3: memref<16x128xf32, #tpu.memory_space<vmem>>, %arg4: memref<1x8x128xf32, #tpu.memory_space<vmem>>, %arg5: memref<1x8x128xf32, #tpu.memory_space<vmem>>) attributes {dimension_semantics = [#tpu.dimension_semantics<parallel>, #tpu.dimension_semantics<arbitrary>], iteration_bounds = array<i64: 1, 1>, scalar_prefetch = 0 : i64, scratch_operands = 0 : i64, tpu.core_type = #tpu.core_type<tc>, window_params = [{transform_indices = @transform_0, window_bounds = array<i64: 16, 128>}, {transform_indices = @transform_1, window_bounds = array<i64: 16, 128>}, {transform_indices = @transform_2, window_bounds = array<i64: 1, 8, 128>}, {transform_indices = @transform_3, window_bounds = array<i64: 1, 8, 128>}]} {
    %c0_i32 = arith.constant 0 : i32
    %0 = arith.cmpi eq, %arg1, %c0_i32 : i32
    %1 = arith.extui %0 : i1 to i32
    %c0_i32_0 = arith.constant 0 : i32
    %2 = arith.cmpi ne, %1, %c0_i32_0 : i32
    scf.if %2 {
      %cst_20 = arith.constant 0.000000e+00 : f32
      %29 = vector.broadcast %cst_20 : f32 to vector<1x8x128xf32>
      %c0_21 = arith.constant 0 : index
      %c0_22 = arith.constant 0 : index
      %c0_23 = arith.constant 0 : index
      %30 = vector.load %arg4[%c0_21, %c0_22, %c0_23] : memref<1x8x128xf32, #tpu.memory_space<vmem>>, vector<1x8x128xf32>
      tpu.vector_store %arg4[%c0_21, %c0_22, %c0_23], %29 {strides = array<i32>} : memref<1x8x128xf32, #tpu.memory_space<vmem>>, vector<1x8x128xf32>,
      %cst_24 = arith.constant 0.000000e+00 : f32
      %31 = vector.broadcast %cst_24 : f32 to vector<1x8x128xf32>
      %c0_25 = arith.constant 0 : index
      %c0_26 = arith.constant 0 : index
      %c0_27 = arith.constant 0 : index
      %32 = vector.load %arg5[%c0_25, %c0_26, %c0_27] : memref<1x8x128xf32, #tpu.memory_space<vmem>>, vector<1x8x128xf32>
      tpu.vector_store %arg5[%c0_25, %c0_26, %c0_27], %31 {strides = array<i32>} : memref<1x8x128xf32, #tpu.memory_space<vmem>>, vector<1x8x128xf32>,
    } else {
    }
    %c0 = arith.constant 0 : index
    %c0_1 = arith.constant 0 : index
    %3 = vector.load %arg3[%c0, %c0_1] : memref<16x128xf32, #tpu.memory_space<vmem>>, vector<16x128xf32>
    %c0_2 = arith.constant 0 : index
    %c0_3 = arith.constant 0 : index
    %4 = vector.load %arg2[%c0_2, %c0_3] : memref<16x128xf32, #tpu.memory_space<vmem>>, vector<16x128xf32>
    %5 = arith.subf %3, %4 : vector<16x128xf32>
    %cst = arith.constant 5.000000e-01 : f32
    %6 = vector.broadcast %cst : f32 to vector<16x128xf32>
    %7 = arith.subf %3, %6 : vector<16x128xf32>
    %8 = arith.mulf %7, %7 : vector<16x128xf32>
    %cst_4 = arith.constant 9.99999974E-6 : f32
    %9 = vector.broadcast %cst_4 : f32 to vector<16x128xf32>
    %10 = arith.addf %8, %9 : vector<16x128xf32>
    %11 = tpu.reciprocal %10 {approx = true} : vector<16x128xf32> -> vector<16x128xf32>
    %12 = arith.mulf %10, %11 : vector<16x128xf32>
    %cst_5 = arith.constant 2.000000e+00 : f32
    %13 = vector.broadcast %cst_5 : f32 to vector<16x128xf32>
    %14 = arith.subf %13, %12 : vector<16x128xf32>
    %15 = arith.mulf %11, %14 : vector<16x128xf32>
    %16 = arith.mulf %5, %5 : vector<16x128xf32>
    %17 = vector.shape_cast %16 : vector<16x128xf32> to vector<2x8x128xf32>
    %18 = vector.shape_cast %15 : vector<16x128xf32> to vector<2x8x128xf32>
    %c0_6 = arith.constant 0 : index
    %c0_7 = arith.constant 0 : index
    %c0_8 = arith.constant 0 : index
    %19 = vector.load %arg4[%c0_6, %c0_7, %c0_8] : memref<1x8x128xf32, #tpu.memory_space<vmem>>, vector<1x8x128xf32>
    %cst_9 = arith.constant dense<0.000000e+00> : vector<8x128xf32>
    %20 = vector.multi_reduction <add>, %17, %cst_9 [0] : vector<2x8x128xf32> to vector<8x128xf32>
    %21 = vector.shape_cast %20 : vector<8x128xf32> to vector<1x8x128xf32>
    %22 = arith.addf %19, %21 : vector<1x8x128xf32>
    %c0_10 = arith.constant 0 : index
    %c0_11 = arith.constant 0 : index
    %c0_12 = arith.constant 0 : index
    %23 = vector.load %arg4[%c0_10, %c0_11, %c0_12] : memref<1x8x128xf32, #tpu.memory_space<vmem>>, vector<1x8x128xf32>
    tpu.vector_store %arg4[%c0_10, %c0_11, %c0_12], %22 {strides = array<i32>} : memref<1x8x128xf32, #tpu.memory_space<vmem>>, vector<1x8x128xf32>,
    %c0_13 = arith.constant 0 : index
    %c0_14 = arith.constant 0 : index
    %c0_15 = arith.constant 0 : index
    %24 = vector.load %arg5[%c0_13, %c0_14, %c0_15] : memref<1x8x128xf32, #tpu.memory_space<vmem>>, vector<1x8x128xf32>
    %cst_16 = arith.constant dense<0.000000e+00> : vector<8x128xf32>
    %25 = vector.multi_reduction <add>, %18, %cst_16 [0] : vector<2x8x128xf32> to vector<8x128xf32>
    %26 = vector.shape_cast %25 : vector<8x128xf32> to vector<1x8x128xf32>
    %27 = arith.addf %24, %26 : vector<1x8x128xf32>
    %c0_17 = arith.constant 0 : index
    %c0_18 = arith.constant 0 : index
    %c0_19 = arith.constant 0 : index
    %28 = vector.load %arg5[%c0_17, %c0_18, %c0_19] : memref<1x8x128xf32, #tpu.memory_space<vmem>>, vector<1x8x128xf32>
    tpu.vector_store %arg5[%c0_17, %c0_18, %c0_19], %27 {strides = array<i32>} : memref<1x8x128xf32, #tpu.memory_space<vmem>>, vector<1x8x128xf32>,
    return
  }
  func.func @transform_0(%arg0: i32, %arg1: i32) -> (i32, i32) {
    %c1_i32 = arith.constant 1 : i32
    %0 = arith.muli %arg0, %c1_i32 : i32
    %1 = arith.addi %0, %arg1 : i32
    %c0_i32 = arith.constant 0 : i32
    %c0_i32_0 = arith.constant 0 : i32
    return %1, %c0_i32 : i32, i32
  }
  func.func @transform_1(%arg0: i32, %arg1: i32) -> (i32, i32) {
    %c1_i32 = arith.constant 1 : i32
    %0 = arith.muli %arg0, %c1_i32 : i32
    %1 = arith.addi %0, %arg1 : i32
    %c0_i32 = arith.constant 0 : i32
    %c0_i32_0 = arith.constant 0 : i32
    return %1, %c0_i32 : i32, i32
  }
  func.func @transform_2(%arg0: i32, %arg1: i32) -> (i32, i32, i32) {
    %c0_i32 = arith.constant 0 : i32
    %c0_i32_0 = arith.constant 0 : i32
    %c0_i32_1 = arith.constant 0 : i32
    return %arg0, %c0_i32, %c0_i32_0 : i32, i32, i32
  }
  func.func @transform_3(%arg0: i32, %arg1: i32) -> (i32, i32, i32) {
    %c0_i32 = arith.constant 0 : i32
    %c0_i32_0 = arith.constant 0 : i32
    %c0_i32_1 = arith.constant 0 : i32
    return %arg0, %c0_i32, %c0_i32_0 : i32, i32, i32
  }
}

</mosaic_0001>

<llo_original>
// kernel: tandem_loss_l1.1
$region0: #{tandem_loss_l1.1}
  #allocation0 [shape = 'u32[]', space=smem, size = 0x4, offset = 0x4, fixed_abs, tag = 'smem constant byte address 0x4 - core index']
  #allocation1 [shape = 'u32[72,128]{1,0:T(1,128)}', space=vmem, size = 0x9000, scoped, tag = 'internal scratch']
  %s0 = inlined_call_operand.vmem [shape: f32[16,128], index: 0, kind: input, shape index: {}]
  %s1 = inlined_call_operand.vmem [shape: f32[16,128], index: 1, kind: input, shape index: {}]
  %s2 = inlined_call_operand.vmem [shape: f32[1,8,128], index: 2, kind: output, shape index: {0}]
  %s3 = inlined_call_operand.vmem [shape: f32[1,8,128], index: 3, kind: output, shape index: {1}]
  %4 = xla_tuple %s2, %s3
  %s5 = sld [smem:[#allocation0]]
  $region30: #{tandem_loss_l1.1} parent=0
    _
  %s7 = ssub.s32 1, %s5
  %s8 = scalar_select 0, %s7, %s5
  // Predicated region
  $region2: #{tandem_loss_l1.1} parent=0 // pred_check
    _
  $region3: #{tandem_loss_l1.1} parent=0 // pred_check_branch
    %10 = sbr.rel (0) target = $region5
  $region4: #{tandem_loss_l1.1} parent=0 // pred_region
    %s11 = sadd.s32 0, 0
    %s12 = smul.u32 2, %s11
    %p13 = scmp.lt.s32.totalorder %s12, 1
    %s14 = scalar_select %p13, %s12, 1
    %s15 = smul.addr %s14, 8
    %s16 = scalar_lea.vmem %s0, %s15
    %s17 = sadd.s32 0, 0
    %s18 = smul.u32 2, %s17
  $region5: #{tandem_loss_l1.1} parent=0 // pred_fallthru
    _
  // Predicated region
  $region6: #{tandem_loss_l1.1} parent=0 // pred_check
    _
  $region7: #{tandem_loss_l1.1} parent=0 // pred_check_branch
    %20 = sbr.rel (0) target = $region9
  $region8: #{tandem_loss_l1.1} parent=0 // pred_region
    %s21 = sadd.s32 0, 0
    %s22 = smul.u32 2, %s21
    %p23 = scmp.lt.s32.totalorder %s22, 1
    %s24 = scalar_select %p23, %s22, 1
    %s25 = smul.addr %s24, 8
    %s26 = scalar_lea.vmem %s1, %s25
    %s27 = sadd.s32 0, 0
    %s28 = smul.u32 2, %s27
  $region9: #{tandem_loss_l1.1} parent=0 // pred_fallthru
    _
  %s29 = sadd.s32 0, 0
  %s30 = smul.u32 2, %s29
  %p31 = scmp.lt.s32.totalorder %s30, 1
  %s32 = scalar_select %p31, %s30, 1
  %s33 = smul.addr %s32, 8
  %s34 = scalar_lea.vmem %s0, %s33
  %s35 = sadd.s32 0, 0
  %s36 = smul.u32 2, %s35
  %p37 = scmp.lt.s32.totalorder %s36, 1
  %s38 = scalar_select %p37, %s36, 1
  %s39 = smul.addr %s38, 8
  %s40 = scalar_lea.vmem %s1, %s39
  %s41 = sadd.s32 0, 0
  %s42 = smul.u32 2, %s41
  %p43 = scmp.lt.s32.totalorder %s42, 1
  %s44 = scalar_select %p43, %s42, 1
  %s45 = smul.addr %s44, 8
  %s46 = scalar_lea.vmem %s0, %s45
  %s47 = sadd.s32 0, 0
  %s48 = smul.u32 2, %s47
  %s49 = sadd.s32 0, 0
  %s50 = smul.u32 2, %s49
  %p51 = scmp.lt.s32.totalorder %s50, 1
  %s52 = scalar_select %p51, %s50, 1
  %s53 = smul.addr %s52, 8
  %s54 = scalar_lea.vmem %s1, %s53
  %s55 = sadd.s32 0, 0
  %s56 = smul.u32 2, %s55
  %p57 = scmp.eq.s32.totalorder 0, 0
  // Predicated region
  $region10: #{tandem_loss_l1.1} parent=0 // pred_check
    %p58 = pneg %p57
  $region11: #{tandem_loss_l1.1} parent=0 // pred_check_branch
    %60 = sbr.rel (%p58) target = $region13
  $region12: #{tandem_loss_l1.1} parent=0 // pred_region
    %61 = vst [vmem:[%s2] sm:$0xff] 0.0
    %62 = vst [vmem:[%s3] sm:$0xff] 0.0
  $region13: #{tandem_loss_l1.1} parent=0 // pred_fallthru
    _
  %v63 = vld [vmem:[%s54] sm:$0xff]
  %v64 = vld [vmem:[%s54 + $0x8] sm:$0xff]
  %v65 = vld [vmem:[%s46] sm:$0xff]
  %v66 = vld [vmem:[%s46 + $0x8] sm:$0xff]
  %v67 = vsub.f32 %v63, %v65
  %v68 = vsub.f32 %v64, %v66
  %v69 = vsub.f32 %v63, 0.5
  %v70 = vsub.f32 %v64, 0.5
  %v71 = vmul.f32 %v69, %v69
  %v72 = vmul.f32 %v70, %v70
  %v73 = vadd.f32 %v71, 1e-05
  %v74 = vadd.f32 %v72, 1e-05
  %v75 = vrcp.pop %v73
  %v76 = vrcp.pop %v74
  %v77 = vmul.f32 %v73, %v75
  %v78 = vmul.f32 %v74, %v76
  %v79 = vsub.f32 2.0, %v77
  %v80 = vsub.f32 2.0, %v78
  %v81 = vmul.f32 %v75, %v79
  %v82 = vmul.f32 %v76, %v80
  %v83 = vmul.f32 %v67, %v67
  %v84 = vmul.f32 %v68, %v68
  %v85 = vld [vmem:[%s2] sm:$0xff]
  %v86 = vadd.f32 %v83, %v84
  %v87 = vadd.f32 %v85, %v86
  %88 = vst [vmem:[%s2] sm:$0xff] %v87
  %v89 = vld [vmem:[%s3] sm:$0xff]
  %v90 = vadd.f32 %v81, %v82
  %v91 = vadd.f32 %v89, %v90
  %92 = vst [vmem:[%s3] sm:$0xff] %v91
  // Predicated region
  $region14: #{tandem_loss_l1.1} parent=0 // pred_check
    _
  $region15: #{tandem_loss_l1.1} parent=0 // pred_check_branch
    %94 = sbr.rel (0) target = $region17
  $region16: #{tandem_loss_l1.1} parent=0 // pred_region
    _
  $region17: #{tandem_loss_l1.1} parent=0 // pred_fallthru
    _
  // Predicated region
  $region18: #{tandem_loss_l1.1} parent=0 // pred_check
    _
  $region19: #{tandem_loss_l1.1} parent=0 // pred_check_branch
    %96 = sbr.rel (0) target = $region21
  $region20: #{tandem_loss_l1.1} parent=0 // pred_region
    _
  $region21: #{tandem_loss_l1.1} parent=0 // pred_fallthru
    _
  // Predicated region
  $region22: #{tandem_loss_l1.1} parent=0 // pred_check
    _
  $region23: #{tandem_loss_l1.1} parent=0 // pred_check_branch
    %98 = sbr.rel (0) target = $region25
  $region24: #{tandem_loss_l1.1} parent=0 // pred_region
    _
  $region25: #{tandem_loss_l1.1} parent=0 // pred_fallthru
    _
  // Predicated region
  $region26: #{tandem_loss_l1.1} parent=0 // pred_check
    _
  $region27: #{tandem_loss_l1.1} parent=0 // pred_check_branch
    %100 = sbr.rel (0) target = $region29
  $region28: #{tandem_loss_l1.1} parent=0 // pred_region
    _
  $region29: #{tandem_loss_l1.1} parent=0 // pred_fallthru
    _

</llo_original>
